<compile_context>
chip_gen: v7x
topology: tpu7x:2x2x1
jax: 0.10.0
libtpu: 0.0.40
codegen_flags: <defaults>
</compile_context>

<pallas_src>
import functools

import jax
import jax.numpy as jnp
from jax.experimental import pallas as pl
from jax.experimental.pallas import tpu as pltpu

IN_DIM = 512
HID_DIM = 512
OUT_DIM = 8
OUT_PAD = 128  # lane-dense padded output width


def mlp_kernel(x_ref, w1_ref, b1_ref, w2_ref, b2_ref, o_ref):
    # x: (TB, 512) f32, w1: (512, 512) bf16, b1: (1, 512) f32,
    # w2: (512, 128) bf16 (zero-padded), b2: (1, 128) f32 (zero-padded)
    x = x_ref[...]

    # fc1: bf16 operands -> MXU, f32 accumulation; bias + ReLU in f32 on VPU.
    h = jnp.dot(x.astype(jnp.bfloat16), w1_ref[...],
                preferred_element_type=jnp.float32)
    h = jnp.maximum(h + b1_ref[...], 0.0)

    # dropout(p=0.5) -> identity in inference mode.

    # fc2 (padded to 128 output lanes for unmasked, lane-dense stores).
    out = jnp.dot(h.astype(jnp.bfloat16), w2_ref[...],
                  preferred_element_type=jnp.float32) + b2_ref[...]
    o_ref[...] = out.astype(o_ref.dtype)


@functools.partial(jax.jit, static_argnames=("tb",))
def mlp_forward(x, w1, b1, w2, b2, *, tb=1024):
    """x: (B, 512) f32. w1: (512, 512), b1: (512,)|(1,512), w2: (512, 8), b2: (8,)|(1,8)."""
    B = x.shape[0]

    # Cast weights to bf16 once, outside the kernel / grid loop.
    w1_bf = w1.astype(jnp.bfloat16)
    b1_r = jnp.reshape(b1, (1, HID_DIM)).astype(jnp.float32)

    # Pad fc2 to 128 output lanes (zeros) for lane-dense stores.
    w2_p = jnp.zeros((HID_DIM, OUT_PAD), jnp.bfloat16).at[:, :OUT_DIM].set(
        w2.astype(jnp.bfloat16))
    b2_p = jnp.zeros((1, OUT_PAD), jnp.float32).at[:, :OUT_DIM].set(
        jnp.reshape(b2, (1, OUT_DIM)).astype(jnp.float32))

    # Batch tiling: TB multiple of 8 (f32 sublanes); pad B so the grid is exact.
    b_pad8 = pl.cdiv(B, 8) * 8
    tb_eff = min(tb, b_pad8)
    b_pad = pl.cdiv(b_pad8, tb_eff) * tb_eff
    x_p = x if b_pad == B else jnp.pad(x, ((0, b_pad - B), (0, 0)))

    grid = (b_pad // tb_eff,)

    out_padded = pl.pallas_call(
        mlp_kernel,
        out_shape=jax.ShapeDtypeStruct((b_pad, OUT_PAD), x.dtype),
        grid=grid,
        in_specs=[
            pl.BlockSpec((tb_eff, IN_DIM), lambda i: (i, 0)),     # x tile
            pl.BlockSpec((HID_DIM, HID_DIM), lambda i: (0, 0)),   # w1 (resident)
            pl.BlockSpec((1, HID_DIM), lambda i: (0, 0)),         # b1 (resident)
            pl.BlockSpec((HID_DIM, OUT_PAD), lambda i: (0, 0)),   # w2 (resident)
            pl.BlockSpec((1, OUT_PAD), lambda i: (0, 0)),         # b2 (resident)
        ],
        out_specs=pl.BlockSpec((tb_eff, OUT_PAD), lambda i: (i, 0)),
        compiler_params=pltpu.CompilerParams(
            dimension_semantics=("parallel",),
        ),
    )(x_p, w1_bf, b1_r, w2_p, b2_p)

    return out_padded[:B, :OUT_DIM]


def init_params(key):
    # Deterministic init mimicking PyTorch Linear default: U(-1/sqrt(fan_in), 1/sqrt(fan_in)).
    # Weights stored pre-transposed as (in_features, out_features) so y = x @ W + b.
    k1, k2, k3, k4 = jax.random.split(key, 4)
    bound1 = 1.0 / jnp.sqrt(float(IN_DIM))
    w1 = jax.random.uniform(k1, (IN_DIM, HID_DIM), jnp.float32, -bound1, bound1)
    b1 = jax.random.uniform(k2, (HID_DIM,), jnp.float32, -bound1, bound1)
    bound2 = 1.0 / jnp.sqrt(float(HID_DIM))
    w2 = jax.random.uniform(k3, (HID_DIM, OUT_DIM), jnp.float32, -bound2, bound2)
    b2 = jax.random.uniform(k4, (OUT_DIM,), jnp.float32, -bound2, bound2)
    return w1, b1, w2, b2


if __name__ == "__main__":
    key = jax.random.PRNGKey(0)
    kx, kp = jax.random.split(key)

    B = 64  # small batch; feature width fixed at 512 by the module definition
    x = jax.random.normal(kx, (B, IN_DIM), jnp.float32)
    w1, b1, w2, b2 = init_params(kp)

    out = mlp_forward(x, w1, b1, w2, b2)
    out = jax.block_until_ready(out)
    assert out.shape == (B, OUT_DIM)

    # Reference 1: same bf16-operand / f32-accumulate semantics (tight check).
    h_ref = jnp.dot(x.astype(jnp.bfloat16), w1.astype(jnp.bfloat16),
                    preferred_element_type=jnp.float32) + b1[None, :]
    h_ref = jnp.maximum(h_ref, 0.0)
    ref_bf16 = jnp.dot(h_ref.astype(jnp.bfloat16), w2.astype(jnp.bfloat16),
                       preferred_element_type=jnp.float32) + b2[None, :]
    assert jnp.allclose(out, ref_bf16, atol=2e-3, rtol=2e-3), \
        float(jnp.max(jnp.abs(out - ref_bf16)))

    # Reference 2: pure f32 semantics (loose sanity check for bf16 rounding).
    ref_f32 = jnp.maximum(x @ w1 + b1[None, :], 0.0) @ w2 + b2[None, :]
    assert jnp.allclose(out, ref_f32, atol=5e-2, rtol=5e-2), \
        float(jnp.max(jnp.abs(out - ref_f32)))

    print("KERNEL_OK")
</pallas_src>

<mosaic_0001>
module attributes {stable_mosaic.version = 11 : i64} {
  func.func @mlp_kernel(%arg0: i32, %arg1: memref<64x512xf32, #tpu.memory_space<vmem>>, %arg2: memref<512x512xbf16, #tpu.memory_space<vmem>>, %arg3: memref<1x512xf32, #tpu.memory_space<vmem>>, %arg4: memref<512x128xbf16, #tpu.memory_space<vmem>>, %arg5: memref<1x128xf32, #tpu.memory_space<vmem>>, %arg6: memref<64x128xf32, #tpu.memory_space<vmem>>) attributes {dimension_semantics = [#tpu.dimension_semantics<parallel>], iteration_bounds = array<i64: 1>, scalar_prefetch = 0 : i64, scratch_operands = 0 : i64, tpu.core_type = #tpu.core_type<tc>, window_params = [{transform_indices = @transform_0, window_bounds = array<i64: 64, 512>}, {pipeline_mode = #tpu.pipeline_mode<synchronous>, transform_indices = @transform_1, window_bounds = array<i64: 512, 512>}, {pipeline_mode = #tpu.pipeline_mode<synchronous>, transform_indices = @transform_2, window_bounds = array<i64: 1, 512>}, {pipeline_mode = #tpu.pipeline_mode<synchronous>, transform_indices = @transform_3, window_bounds = array<i64: 512, 128>}, {pipeline_mode = #tpu.pipeline_mode<synchronous>, transform_indices = @transform_4, window_bounds = array<i64: 1, 128>}, {transform_indices = @transform_5, window_bounds = array<i64: 64, 128>}]} {
    %c0 = arith.constant 0 : index
    %c0_0 = arith.constant 0 : index
    %0 = vector.load %arg1[%c0, %c0_0] : memref<64x512xf32, #tpu.memory_space<vmem>>, vector<64x512xf32>
    %1 = arith.truncf %0 : vector<64x512xf32> to vector<64x512xbf16>
    %c0_1 = arith.constant 0 : index
    %c0_2 = arith.constant 0 : index
    %2 = vector.load %arg2[%c0_1, %c0_2] : memref<512x512xbf16, #tpu.memory_space<vmem>>, vector<512x512xbf16>
    %cst = arith.constant dense<0.000000e+00> : vector<64x512xf32>
    %3 = tpu.matmul %1, %2, %cst {dimension_numbers = #tpu.dot_dimension_numbers<[1], [0], [0], [1], [0, 0, 1, 1], [], []>} : vector<64x512xbf16>, vector<512x512xbf16>, vector<64x512xf32> -> vector<64x512xf32>
    %c0_3 = arith.constant 0 : index
    %c0_4 = arith.constant 0 : index
    %4 = vector.load %arg3[%c0_3, %c0_4] : memref<1x512xf32, #tpu.memory_space<vmem>>, vector<1x512xf32>
    %5 = vector.broadcast %4 : vector<1x512xf32> to vector<64x512xf32>
    %6 = arith.addf %3, %5 : vector<64x512xf32>
    %cst_5 = arith.constant 0.000000e+00 : f32
    %7 = vector.broadcast %cst_5 : f32 to vector<64x512xf32>
    %8 = arith.maximumf %6, %7 : vector<64x512xf32>
    %9 = arith.truncf %8 : vector<64x512xf32> to vector<64x512xbf16>
    %c0_6 = arith.constant 0 : index
    %c0_7 = arith.constant 0 : index
    %10 = vector.load %arg4[%c0_6, %c0_7] : memref<512x128xbf16, #tpu.memory_space<vmem>>, vector<512x128xbf16>
    %cst_8 = arith.constant dense<0.000000e+00> : vector<64x128xf32>
    %11 = tpu.matmul %9, %10, %cst_8 {dimension_numbers = #tpu.dot_dimension_numbers<[1], [0], [0], [1], [0, 0, 1, 1], [], []>} : vector<64x512xbf16>, vector<512x128xbf16>, vector<64x128xf32> -> vector<64x128xf32>
    %c0_9 = arith.constant 0 : index
    %c0_10 = arith.constant 0 : index
    %12 = vector.load %arg5[%c0_9, %c0_10] : memref<1x128xf32, #tpu.memory_space<vmem>>, vector<1x128xf32>
    %13 = vector.broadcast %12 : vector<1x128xf32> to vector<64x128xf32>
    %14 = arith.addf %11, %13 : vector<64x128xf32>
    %c0_11 = arith.constant 0 : index
    %c0_12 = arith.constant 0 : index
    %15 = vector.load %arg6[%c0_11, %c0_12] : memref<64x128xf32, #tpu.memory_space<vmem>>, vector<64x128xf32>
    tpu.vector_store %arg6[%c0_11, %c0_12], %14 {strides = array<i32>} : memref<64x128xf32, #tpu.memory_space<vmem>>, vector<64x128xf32>,
    return
  }
  func.func @transform_0(%arg0: i32) -> (i32, i32) {
    %c0_i32 = arith.constant 0 : i32
    %c0_i32_0 = arith.constant 0 : i32
    return %arg0, %c0_i32 : i32, i32
  }
  func.func @transform_1(%arg0: i32) -> (i32, i32) {
    %c0_i32 = arith.constant 0 : i32
    %c0_i32_0 = arith.constant 0 : i32
    %c0_i32_1 = arith.constant 0 : i32
    return %c0_i32, %c0_i32_0 : i32, i32
  }
  func.func @transform_2(%arg0: i32) -> (i32, i32) {
    %c0_i32 = arith.constant 0 : i32
    %c0_i32_0 = arith.constant 0 : i32
    %c0_i32_1 = arith.constant 0 : i32
    return %c0_i32, %c0_i32_0 : i32, i32
  }
  func.func @transform_3(%arg0: i32) -> (i32, i32) {
    %c0_i32 = arith.constant 0 : i32
    %c0_i32_0 = arith.constant 0 : i32
    %c0_i32_1 = arith.constant 0 : i32
    return %c0_i32, %c0_i32_0 : i32, i32
  }
  func.func @transform_4(%arg0: i32) -> (i32, i32) {
    %c0_i32 = arith.constant 0 : i32
    %c0_i32_0 = arith.constant 0 : i32
    %c0_i32_1 = arith.constant 0 : i32
    return %c0_i32, %c0_i32_0 : i32, i32
  }
  func.func @transform_5(%arg0: i32) -> (i32, i32) {
    %c0_i32 = arith.constant 0 : i32
    %c0_i32_0 = arith.constant 0 : i32
    return %arg0, %c0_i32 : i32, i32
  }
}

</mosaic_0001>

<llo_original>
// kernel: mlp_forward.1
$region0: #{mlp_forward.1}
  #allocation0 [shape = 'u32[]', space=smem, size = 0x4, offset = 0x4, fixed_abs, tag = 'smem constant byte address 0x4 - core index']
  #allocation1 [shape = 'u32[144,128]{1,0:T(1,128)}', space=vmem, size = 0x12000, scoped, tag = 'internal scratch']
  %s0 = inlined_call_operand.vmem [shape: f32[64,512], index: 0, kind: input, shape index: {}]
  %s1 = inlined_call_operand.vmem [shape: bf16[512,512], index: 1, kind: input, shape index: {}]
  %s2 = inlined_call_operand.vmem [shape: f32[1,512], index: 2, kind: input, shape index: {}]
  %s3 = inlined_call_operand.vmem [shape: bf16[512,128], index: 3, kind: input, shape index: {}]
  %s4 = inlined_call_operand.vmem [shape: f32[1,128], index: 4, kind: input, shape index: {}]
  %s5 = inlined_call_operand.vmem [shape: f32[64,128], index: 5, kind: output, shape index: {}]
  %s6 = sld [smem:[#allocation0]]
  $region30: #{mlp_forward.1} parent=0
    _
  %s8 = ssub.s32 1, %s6
  %s9 = scalar_select 0, %s8, %s6
  // Predicated region
  $region2: #{mlp_forward.1} parent=0 // pred_check
    _
  $region3: #{mlp_forward.1} parent=0 // pred_check_branch
    %11 = sbr.rel (0) target = $region5
  $region4: #{mlp_forward.1} parent=0 // pred_region
    _
  $region5: #{mlp_forward.1} parent=0 // pred_fallthru
    _
  // Predicated region
  $region6: #{mlp_forward.1} parent=0 // pred_check
    _
  $region7: #{mlp_forward.1} parent=0 // pred_check_branch
    %13 = sbr.rel (0) target = $region9
  $region8: #{mlp_forward.1} parent=0 // pred_region
    _
  $region9: #{mlp_forward.1} parent=0 // pred_fallthru
    _
  // Predicated region
  $region10: #{mlp_forward.1} parent=0 // pred_check
    _
  $region11: #{mlp_forward.1} parent=0 // pred_check_branch
    %15 = sbr.rel (0) target = $region13
  $region12: #{mlp_forward.1} parent=0 // pred_region
    _
  $region13: #{mlp_forward.1} parent=0 // pred_fallthru
    _
  // Predicated region
  $region14: #{mlp_forward.1} parent=0 // pred_check
    _
  $region15: #{mlp_forward.1} parent=0 // pred_check_branch
    %17 = sbr.rel (0) target = $region17
  $region16: #{mlp_forward.1} parent=0 // pred_region
    _
  $region17: #{mlp_forward.1} parent=0 // pred_fallthru
    _
  // Predicated region
  $region18: #{mlp_forward.1} parent=0 // pred_check
    _
  $region19: #{mlp_forward.1} parent=0 // pred_check_branch
    %19 = sbr.rel (0) target = $region21
  $region20: #{mlp_forward.1} parent=0 // pred_region
    _
  $region21: #{mlp_forward.1} parent=0 // pred_fallthru
    _
  %v21 = vld [vmem:[%s0] sm:$0xff]
  %v22 = vld [vmem:[%s0 + $0x8] sm:$0xff]
  %v23 = vld [vmem:[%s0 + $0x10] sm:$0xff]
  %v24 = vld [vmem:[%s0 + $0x18] sm:$0xff]
  %v25 = vld [vmem:[%s0 + $0x20] sm:$0xff]
  %v26 = vld [vmem:[%s0 + $0x28] sm:$0xff]
  %v27 = vld [vmem:[%s0 + $0x30] sm:$0xff]
  %v28 = vld [vmem:[%s0 + $0x38] sm:$0xff]
  %v29 = vld [vmem:[%s0 + $0x40] sm:$0xff]
  %v30 = vld [vmem:[%s0 + $0x48] sm:$0xff]
  %v31 = vld [vmem:[%s0 + $0x50] sm:$0xff]
  %v32 = vld [vmem:[%s0 + $0x58] sm:$0xff]
  %v33 = vld [vmem:[%s0 + $0x60] sm:$0xff]
  %v34 = vld [vmem:[%s0 + $0x68] sm:$0xff]
  %v35 = vld [vmem:[%s0 + $0x70] sm:$0xff]
  %v36 = vld [vmem:[%s0 + $0x78] sm:$0xff]
  %v37 = vld [vmem:[%s0 + $0x80] sm:$0xff]
  %v38 = vld [vmem:[%s0 + $0x88] sm:$0xff]
  %v39 = vld [vmem:[%s0 + $0x90] sm:$0xff]
  %v40 = vld [vmem:[%s0 + $0x98] sm:$0xff]
  %v41 = vld [vmem:[%s0 + $0xa0] sm:$0xff]
  %v42 = vld [vmem:[%s0 + $0xa8] sm:$0xff]
  %v43 = vld [vmem:[%s0 + $0xb0] sm:$0xff]
  %v44 = vld [vmem:[%s0 + $0xb8] sm:$0xff]
  %v45 = vld [vmem:[%s0 + $0xc0] sm:$0xff]
  %v46 = vld [vmem:[%s0 + $0xc8] sm:$0xff]
  %v47 = vld [vmem:[%s0 + $0xd0] sm:$0xff]
  %v48 = vld [vmem:[%s0 + $0xd8] sm:$0xff]
  %v49 = vld [vmem:[%s0 + $0xe0] sm:$0xff]
  %v50 = vld [vmem:[%s0 + $0xe8] sm:$0xff]
  %v51 = vld [vmem:[%s0 + $0xf0] sm:$0xff]
  %v52 = vld [vmem:[%s0 + $0xf8] sm:$0xff]
  %v53 = vpack.c.bf16 %v25, %v21
  %v54 = vpack.c.bf16 %v26, %v22
  %v55 = vpack.c.bf16 %v27, %v23
  %v56 = vpack.c.bf16 %v28, %v24
  %v57 = vpack.c.bf16 %v33, %v29
  %v58 = vpack.c.bf16 %v34, %v30
  %v59 = vpack.c.bf16 %v35, %v31
  %v60 = vpack.c.bf16 %v36, %v32
  %v61 = vpack.c.bf16 %v41, %v37
  %v62 = vpack.c.bf16 %v42, %v38
  %v63 = vpack.c.bf16 %v43, %v39
  %v64 = vpack.c.bf16 %v44, %v40
  %v65 = vpack.c.bf16 %v49, %v45
  %v66 = vpack.c.bf16 %v50, %v46
  %v67 = vpack.c.bf16 %v51, %v47
  %v68 = vpack.c.bf16 %v52, %v48
  %v69 = vld [vmem:[%s1] sm:$0xff]
  %v70 = vld [vmem:[%s1 + $0x8] sm:$0xff]
  %v71 = vld [vmem:[%s1 + $0x10] sm:$0xff]
  %v72 = vld [vmem:[%s1 + $0x18] sm:$0xff]
  %v73 = vld [vmem:[%s1 + $0x20] sm:$0xff]
  %v74 = vld [vmem:[%s1 + $0x28] sm:$0xff]
  %v75 = vld [vmem:[%s1 + $0x30] sm:$0xff]
  %v76 = vld [vmem:[%s1 + $0x38] sm:$0xff]
  %v77 = vld [vmem:[%s1 + $0x40] sm:$0xff]
  %v78 = vld [vmem:[%s1 + $0x48] sm:$0xff]
  %v79 = vld [vmem:[%s1 + $0x50] sm:$0xff]
  %v80 = vld [vmem:[%s1 + $0x58] sm:$0xff]
  %v81 = vld [vmem:[%s1 + $0x60] sm:$0xff]
  %v82 = vld [vmem:[%s1 + $0x68] sm:$0xff]
  %v83 = vld [vmem:[%s1 + $0x70] sm:$0xff]
  %v84 = vld [vmem:[%s1 + $0x78] sm:$0xff]
  %v85 = vld [vmem:[%s1 + $0x80] sm:$0xff]
  %v86 = vld [vmem:[%s1 + $0x88] sm:$0xff]
  %v87 = vld [vmem:[%s1 + $0x90] sm:$0xff]
  %v88 = vld [vmem:[%s1 + $0x98] sm:$0xff]
  %v89 = vld [vmem:[%s1 + $0xa0] sm:$0xff]
  %v90 = vld [vmem:[%s1 + $0xa8] sm:$0xff]
  %v91 = vld [vmem:[%s1 + $0xb0] sm:$0xff]
  %v92 = vld [vmem:[%s1 + $0xb8] sm:$0xff]
  %v93 = vld [vmem:[%s1 + $0xc0] sm:$0xff]
  %v94 = vld [vmem:[%s1 + $0xc8] sm:$0xff]
  %v95 = vld [vmem:[%s1 + $0xd0] sm:$0xff]
  %v96 = vld [vmem:[%s1 + $0xd8] sm:$0xff]
  %v97 = vld [vmem:[%s1 + $0xe0] sm:$0xff]
  %v98 = vld [vmem:[%s1 + $0xe8] sm:$0xff]
  %v99 = vld [vmem:[%s1 + $0xf0] sm:$0xff]
  %v100 = vld [vmem:[%s1 + $0xf8] sm:$0xff]
  %v101 = vld [vmem:[%s1 + $0x100] sm:$0xff]
  %v102 = vld [vmem:[%s1 + $0x108] sm:$0xff]
  %v103 = vld [vmem:[%s1 + $0x110] sm:$0xff]
  %v104 = vld [vmem:[%s1 + $0x118] sm:$0xff]
  %v105 = vld [vmem:[%s1 + $0x120] sm:$0xff]
  %v106 = vld [vmem:[%s1 + $0x128] sm:$0xff]
  %v107 = vld [vmem:[%s1 + $0x130] sm:$0xff]
  %v108 = vld [vmem:[%s1 + $0x138] sm:$0xff]
  %v109 = vld [vmem:[%s1 + $0x140] sm:$0xff]
  %v110 = vld [vmem:[%s1 + $0x148] sm:$0xff]
  %v111 = vld [vmem:[%s1 + $0x150] sm:$0xff]
  %v112 = vld [vmem:[%s1 + $0x158] sm:$0xff]
  %v113 = vld [vmem:[%s1 + $0x160] sm:$0xff]
  %v114 = vld [vmem:[%s1 + $0x168] sm:$0xff]
  %v115 = vld [vmem:[%s1 + $0x170] sm:$0xff]
  %v116 = vld [vmem:[%s1 + $0x178] sm:$0xff]
  %v117 = vld [vmem:[%s1 + $0x180] sm:$0xff]
  %v118 = vld [vmem:[%s1 + $0x188] sm:$0xff]
  %v119 = vld [vmem:[%s1 + $0x190] sm:$0xff]
  %v120 = vld [vmem:[%s1 + $0x198] sm:$0xff]
  %v121 = vld [vmem:[%s1 + $0x1a0] sm:$0xff]
  %v122 = vld [vmem:[%s1 + $0x1a8] sm:$0xff]
  %v123 = vld [vmem:[%s1 + $0x1b0] sm:$0xff]
  %v124 = vld [vmem:[%s1 + $0x1b8] sm:$0xff]
  %v125 = vld [vmem:[%s1 + $0x1c0] sm:$0xff]
  %v126 = vld [vmem:[%s1 + $0x1c8] sm:$0xff]
  %v127 = vld [vmem:[%s1 + $0x1d0] sm:$0xff]
  %v128 = vld [vmem:[%s1 + $0x1d8] sm:$0xff]
  %v129 = vld [vmem:[%s1 + $0x1e0] sm:$0xff]
  %v130 = vld [vmem:[%s1 + $0x1e8] sm:$0xff]
  %v131 = vld [vmem:[%s1 + $0x1f0] sm:$0xff]
  %v132 = vld [vmem:[%s1 + $0x1f8] sm:$0xff]
  %v133 = vld [vmem:[%s1 + $0x200] sm:$0xff]
  %v134 = vld [vmem:[%s1 + $0x208] sm:$0xff]
  %v135 = vld [vmem:[%s1 + $0x210] sm:$0xff]
  %v136 = vld [vmem:[%s1 + $0x218] sm:$0xff]
  %v137 = vld [vmem:[%s1 + $0x220] sm:$0xff]
  %v138 = vld [vmem:[%s1 + $0x228] sm:$0xff]
  %v139 = vld [vmem:[%s1 + $0x230] sm:$0xff]
  %v140 = vld [vmem:[%s1 + $0x238] sm:$0xff]
  %v141 = vld [vmem:[%s1 + $0x240] sm:$0xff]
  %v142 = vld [vmem:[%s1 + $0x248] sm:$0xff]
  %v143 = vld [vmem:[%s1 + $0x250] sm:$0xff]
  %v144 = vld [vmem:[%s1 + $0x258] sm:$0xff]
  %v145 = vld [vmem:[%s1 + $0x260] sm:$0xff]
  %v146 = vld [vmem:[%s1 + $0x268] sm:$0xff]
  %v147 = vld [vmem:[%s1 + $0x270] sm:$0xff]
  %v148 = vld [vmem:[%s1 + $0x278] sm:$0xff]
  %v149 = vld [vmem:[%s1 + $0x280] sm:$0xff]
  %v150 = vld [vmem:[%s1 + $0x288] sm:$0xff]
  %v151 = vld [vmem:[%s1 + $0x290] sm:$0xff]
  %v152 = vld [vmem:[%s1 + $0x298] sm:$0xff]
  %v153 = vld [vmem:[%s1 + $0x2a0] sm:$0xff]
  %v154 = vld [vmem:[%s1 + $0x2a8] sm:$0xff]
  %v155 = vld [vmem:[%s1 + $0x2b0] sm:$0xff]
  %v156 = vld [vmem:[%s1 + $0x2b8] sm:$0xff]
  %v157 = vld [vmem:[%s1 + $0x2c0] sm:$0xff]
  %v158 = vld [vmem:[%s1 + $0x2c8] sm:$0xff]
  %v159 = vld [vmem:[%s1 + $0x2d0] sm:$0xff]
  %v160 = vld [vmem:[%s1 + $0x2d8] sm:$0xff]
  %v161 = vld [vmem:[%s1 + $0x2e0] sm:$0xff]
  %v162 = vld [vmem:[%s1 + $0x2e8] sm:$0xff]
  %v163 = vld [vmem:[%s1 + $0x2f0] sm:$0xff]
  %v164 = vld [vmem:[%s1 + $0x2f8] sm:$0xff]
  %v165 = vld [vmem:[%s1 + $0x300] sm:$0xff]
  %v166 = vld [vmem:[%s1 + $0x308] sm:$0xff]
  %v167 = vld [vmem:[%s1 + $0x310] sm:$0xff]
  %v168 = vld [vmem:[%s1 + $0x318] sm:$0xff]
  %v169 = vld [vmem:[%s1 + $0x320] sm:$0xff]
  %v170 = vld [vmem:[%s1 + $0x328] sm:$0xff]
  %v171 = vld [vmem:[%s1 + $0x330] sm:$0xff]
  %v172 = vld [vmem:[%s1 + $0x338] sm:$0xff]
  %v173 = vld [vmem:[%s1 + $0x340] sm:$0xff]
  %v174 = vld [vmem:[%s1 + $0x348] sm:$0xff]
  %v175 = vld [vmem:[%s1 + $0x350] sm:$0xff]
  %v176 = vld [vmem:[%s1 + $0x358] sm:$0xff]
  %v177 = vld [vmem:[%s1 + $0x360] sm:$0xff]
  %v178 = vld [vmem:[%s1 + $0x368] sm:$0xff]
  %v179 = vld [vmem:[%s1 + $0x370] sm:$0xff]
  %v180 = vld [vmem:[%s1 + $0x378] sm:$0xff]
  %v181 = vld [vmem:[%s1 + $0x380] sm:$0xff]
  %v182 = vld [vmem:[%s1 + $0x388] sm:$0xff]
  %v183 = vld [vmem:[%s1 + $0x390] sm:$0xff]
  %v184 = vld [vmem:[%s1 + $0x398] sm:$0xff]
  %v185 = vld [vmem:[%s1 + $0x3a0] sm:$0xff]
  %v186 = vld [vmem:[%s1 + $0x3a8] sm:$0xff]
  %v187 = vld [vmem:[%s1 + $0x3b0] sm:$0xff]
  %v188 = vld [vmem:[%s1 + $0x3b8] sm:$0xff]
  %v189 = vld [vmem:[%s1 + $0x3c0] sm:$0xff]
  %v190 = vld [vmem:[%s1 + $0x3c8] sm:$0xff]
  %v191 = vld [vmem:[%s1 + $0x3d0] sm:$0xff]
  %v192 = vld [vmem:[%s1 + $0x3d8] sm:$0xff]
  %v193 = vld [vmem:[%s1 + $0x3e0] sm:$0xff]
  %v194 = vld [vmem:[%s1 + $0x3e8] sm:$0xff]
  %v195 = vld [vmem:[%s1 + $0x3f0] sm:$0xff]
  %v196 = vld [vmem:[%s1 + $0x3f8] sm:$0xff]
  %v197 = vld [vmem:[%s2] sm:$0xf]
  %v199 = vlaneseq
  %v200 = vshrl.u32 %v199, 7
  %v201 = vsub.s32 0, %v200
  %v202 = vrot.slane %v197, %v201
  %v203 = vlaneseq
  %v204 = vshrl.u32 %v203, 7
  %v205 = vsub.s32 1, %v204
  %v206 = vrot.slane %v197, %v205
  %v207 = vlaneseq
  %v208 = vshrl.u32 %v207, 7
  %v209 = vsub.s32 2, %v208
  %v210 = vrot.slane %v197, %v209
  %v211 = vlaneseq
  %v212 = vshrl.u32 %v211, 7
  %v213 = vsub.s32 3, %v212
  %v214 = vrot.slane %v197, %v213
  %v347 = vunpack.c.l.b16 %v69
  %v348 = vunpack.c.h.b16 %v69
  %v349 = vunpack.c.l.b16 %v70
  %v350 = vunpack.c.h.b16 %v70
  %v351 = vunpack.c.l.b16 %v71
  %v352 = vunpack.c.h.b16 %v71
  %v353 = vunpack.c.l.b16 %v72
  %v354 = vunpack.c.h.b16 %v72
  %v355 = vunpack.c.l.b16 %v73
  %v356 = vunpack.c.h.b16 %v73
  %v357 = vunpack.c.l.b16 %v74
  %v358 = vunpack.c.h.b16 %v74
  %v359 = vunpack.c.l.b16 %v75
  %v360 = vunpack.c.h.b16 %v75
  %v361 = vunpack.c.l.b16 %v76
  %v362 = vunpack.c.h.b16 %v76
  %v363 = vunpack.c.l.b16 %v77
  %v364 = vunpack.c.h.b16 %v77
  %v365 = vunpack.c.l.b16 %v78
  %v366 = vunpack.c.h.b16 %v78
  %v367 = vunpack.c.l.b16 %v79
  %v368 = vunpack.c.h.b16 %v79
  %v369 = vunpack.c.l.b16 %v80
  %v370 = vunpack.c.h.b16 %v80
  %v371 = vunpack.c.l.b16 %v81
  %v372 = vunpack.c.h.b16 %v81
  %v373 = vunpack.c.l.b16 %v82
  %v374 = vunpack.c.h.b16 %v82
  %v375 = vunpack.c.l.b16 %v83
  %v376 = vunpack.c.h.b16 %v83
  %v377 = vunpack.c.l.b16 %v84
  %v378 = vunpack.c.h.b16 %v84
  %v379 = vunpack.c.l.b16 %v85
  %v380 = vunpack.c.h.b16 %v85
  %v381 = vunpack.c.l.b16 %v86
  %v382 = vunpack.c.h.b16 %v86
  %v383 = vunpack.c.l.b16 %v87
  %v384 = vunpack.c.h.b16 %v87
  %v385 = vunpack.c.l.b16 %v88
  %v386 = vunpack.c.h.b16 %v88
  %v387 = vunpack.c.l.b16 %v89
  %v388 = vunpack.c.h.b16 %v89
  %v389 = vunpack.c.l.b16 %v90
  %v390 = vunpack.c.h.b16 %v90
  %v391 = vunpack.c.l.b16 %v91
  %v392 = vunpack.c.h.b16 %v91
  %v393 = vunpack.c.l.b16 %v92
  %v394 = vunpack.c.h.b16 %v92
  %v395 = vunpack.c.l.b16 %v93
  %v396 = vunpack.c.h.b16 %v93
  %v397 = vunpack.c.l.b16 %v94
  %v398 = vunpack.c.h.b16 %v94
  %v399 = vunpack.c.l.b16 %v95
  %v400 = vunpack.c.h.b16 %v95
  %v401 = vunpack.c.l.b16 %v96
  %v402 = vunpack.c.h.b16 %v96
  %v403 = vunpack.c.l.b16 %v97
  %v404 = vunpack.c.h.b16 %v97
  %v405 = vunpack.c.l.b16 %v98
  %v406 = vunpack.c.h.b16 %v98
  %v407 = vunpack.c.l.b16 %v99
  %v408 = vunpack.c.h.b16 %v99
  %v409 = vunpack.c.l.b16 %v100
  %v410 = vunpack.c.h.b16 %v100
  %v411 = vunpack.c.l.b16 %v101
  %v412 = vunpack.c.h.b16 %v101
  %v413 = vunpack.c.l.b16 %v102
  %v414 = vunpack.c.h.b16 %v102
  %v415 = vunpack.c.l.b16 %v103
  %v416 = vunpack.c.h.b16 %v103
  %v417 = vunpack.c.l.b16 %v104
  %v418 = vunpack.c.h.b16 %v104
  %v419 = vunpack.c.l.b16 %v105
  %v420 = vunpack.c.h.b16 %v105
  %v421 = vunpack.c.l.b16 %v106
  %v422 = vunpack.c.h.b16 %v106
  %v423 = vunpack.c.l.b16 %v107
  %v424 = vunpack.c.h.b16 %v107
  %v425 = vunpack.c.l.b16 %v108
  %v426 = vunpack.c.h.b16 %v108
  %v427 = vunpack.c.l.b16 %v109
  %v428 = vunpack.c.h.b16 %v109
  %v429 = vunpack.c.l.b16 %v110
  %v430 = vunpack.c.h.b16 %v110
  %v431 = vunpack.c.l.b16 %v111
  %v432 = vunpack.c.h.b16 %v111
  %v433 = vunpack.c.l.b16 %v112
  %v434 = vunpack.c.h.b16 %v112
  %v435 = vunpack.c.l.b16 %v113
  %v436 = vunpack.c.h.b16 %v113
  %v437 = vunpack.c.l.b16 %v114
  %v438 = vunpack.c.h.b16 %v114
  %v439 = vunpack.c.l.b16 %v115
  %v440 = vunpack.c.h.b16 %v115
  %v441 = vunpack.c.l.b16 %v116
  %v442 = vunpack.c.h.b16 %v116
  %v443 = vunpack.c.l.b16 %v117
  %v444 = vunpack.c.h.b16 %v117
  %v445 = vunpack.c.l.b16 %v118
  %v446 = vunpack.c.h.b16 %v118
  %v447 = vunpack.c.l.b16 %v119
  %v448 = vunpack.c.h.b16 %v119
  %v449 = vunpack.c.l.b16 %v120
  %v450 = vunpack.c.h.b16 %v120
  %v451 = vunpack.c.l.b16 %v121
  %v452 = vunpack.c.h.b16 %v121
  %v453 = vunpack.c.l.b16 %v122
  %v454 = vunpack.c.h.b16 %v122
  %v455 = vunpack.c.l.b16 %v123
  %v456 = vunpack.c.h.b16 %v123
  %v457 = vunpack.c.l.b16 %v124
  %v458 = vunpack.c.h.b16 %v124
  %v459 = vunpack.c.l.b16 %v125
  %v460 = vunpack.c.h.b16 %v125
  %v461 = vunpack.c.l.b16 %v126
  %v462 = vunpack.c.h.b16 %v126
  %v463 = vunpack.c.l.b16 %v127
  %v464 = vunpack.c.h.b16 %v127
  %v465 = vunpack.c.l.b16 %v128
  %v466 = vunpack.c.h.b16 %v128
  %v467 = vunpack.c.l.b16 %v129
  %v468 = vunpack.c.h.b16 %v129
  %v469 = vunpack.c.l.b16 %v130
  %v470 = vunpack.c.h.b16 %v130
  %v471 = vunpack.c.l.b16 %v131
  %v472 = vunpack.c.h.b16 %v131
  %v473 = vunpack.c.l.b16 %v132
  %v474 = vunpack.c.h.b16 %v132
  %v475 = vunpack.c.l.b16 %v133
  %v476 = vunpack.c.h.b16 %v133
  %v477 = vunpack.c.l.b16 %v134
  %v478 = vunpack.c.h.b16 %v134
  %v479 = vunpack.c.l.b16 %v135
  %v480 = vunpack.c.h.b16 %v135
  %v481 = vunpack.c.l.b16 %v136
  %v482 = vunpack.c.h.b16 %v136
  %v483 = vunpack.c.l.b16 %v137
  %v484 = vunpack.c.h.b16 %v137
  %v485 = vunpack.c.l.b16 %v138
  %v486 = vunpack.c.h.b16 %v138
  %v487 = vunpack.c.l.b16 %v139
  %v488 = vunpack.c.h.b16 %v139
  %v489 = vunpack.c.l.b16 %v140
  %v490 = vunpack.c.h.b16 %v140
  %v491 = vunpack.c.l.b16 %v141
  %v492 = vunpack.c.h.b16 %v141
  %v493 = vunpack.c.l.b16 %v142
  %v494 = vunpack.c.h.b16 %v142
  %v495 = vunpack.c.l.b16 %v143
  %v496 = vunpack.c.h.b16 %v143
  %v497 = vunpack.c.l.b16 %v144
  %v498 = vunpack.c.h.b16 %v144
  %v499 = vunpack.c.l.b16 %v145
  %v500 = vunpack.c.h.b16 %v145
  %v501 = vunpack.c.l.b16 %v146
  %v502 = vunpack.c.h.b16 %v146
  %v503 = vunpack.c.l.b16 %v147
  %v504 = vunpack.c.h.b16 %v147
  %v505 = vunpack.c.l.b16 %v148
  %v506 = vunpack.c.h.b16 %v148
  %v507 = vunpack.c.l.b16 %v149
  %v508 = vunpack.c.h.b16 %v149
  %v509 = vunpack.c.l.b16 %v150
  %v510 = vunpack.c.h.b16 %v150
  %v511 = vunpack.c.l.b16 %v151
  %v512 = vunpack.c.h.b16 %v151
  %v513 = vunpack.c.l.b16 %v152
  %v514 = vunpack.c.h.b16 %v152
  %v515 = vunpack.c.l.b16 %v153
  %v516 = vunpack.c.h.b16 %v153
  %v517 = vunpack.c.l.b16 %v154
  %v518 = vunpack.c.h.b16 %v154
  %v519 = vunpack.c.l.b16 %v155
  %v520 = vunpack.c.h.b16 %v155
  %v521 = vunpack.c.l.b16 %v156
  %v522 = vunpack.c.h.b16 %v156
  %v523 = vunpack.c.l.b16 %v157
  %v524 = vunpack.c.h.b16 %v157
  %v525 = vunpack.c.l.b16 %v158
  %v526 = vunpack.c.h.b16 %v158
  %v527 = vunpack.c.l.b16 %v159
  %v528 = vunpack.c.h.b16 %v159
  %v529 = vunpack.c.l.b16 %v160
  %v530 = vunpack.c.h.b16 %v160
  %v531 = vunpack.c.l.b16 %v161
  %v532 = vunpack.c.h.b16 %v161
  %v533 = vunpack.c.l.b16 %v162
  %v534 = vunpack.c.h.b16 %v162
  %v535 = vunpack.c.l.b16 %v163
  %v536 = vunpack.c.h.b16 %v163
  %v537 = vunpack.c.l.b16 %v164
  %v538 = vunpack.c.h.b16 %v164
  %v539 = vunpack.c.l.b16 %v165
  %v540 = vunpack.c.h.b16 %v165
  %v541 = vunpack.c.l.b16 %v166
  %v542 = vunpack.c.h.b16 %v166
  %v543 = vunpack.c.l.b16 %v167
  %v544 = vunpack.c.h.b16 %v167
  %v545 = vunpack.c.l.b16 %v168
  %v546 = vunpack.c.h.b16 %v168
  %v547 = vunpack.c.l.b16 %v169
  %v548 = vunpack.c.h.b16 %v169
  %v549 = vunpack.c.l.b16 %v170
  %v550 = vunpack.c.h.b16 %v170
  %v551 = vunpack.c.l.b16 %v171
  %v552 = vunpack.c.h.b16 %v171
  %v553 = vunpack.c.l.b16 %v172
  %v554 = vunpack.c.h.b16 %v172
  %v555 = vunpack.c.l.b16 %v173
  %v556 = vunpack.c.h.b16 %v173
  %v557 = vunpack.c.l.b16 %v174
  %v558 = vunpack.c.h.b16 %v174
  %v559 = vunpack.c.l.b16 %v175
  %v560 = vunpack.c.h.b16 %v175
  %v561 = vunpack.c.l.b16 %v176
  %v562 = vunpack.c.h.b16 %v176
  %v563 = vunpack.c.l.b16 %v177
  %v564 = vunpack.c.h.b16 %v177
  %v565 = vunpack.c.l.b16 %v178
  %v566 = vunpack.c.h.b16 %v178
  %v567 = vunpack.c.l.b16 %v179
  %v568 = vunpack.c.h.b16 %v179
  %v569 = vunpack.c.l.b16 %v180
  %v570 = vunpack.c.h.b16 %v180
  %v571 = vunpack.c.l.b16 %v181
  %v572 = vunpack.c.h.b16 %v181
  %v573 = vunpack.c.l.b16 %v182
  %v574 = vunpack.c.h.b16 %v182
  %v575 = vunpack.c.l.b16 %v183
  %v576 = vunpack.c.h.b16 %v183
  %v577 = vunpack.c.l.b16 %v184
  %v578 = vunpack.c.h.b16 %v184
  %v579 = vunpack.c.l.b16 %v185
  %v580 = vunpack.c.h.b16 %v185
  %v581 = vunpack.c.l.b16 %v186
  %v582 = vunpack.c.h.b16 %v186
  %v583 = vunpack.c.l.b16 %v187
  %v584 = vunpack.c.h.b16 %v187
  %v585 = vunpack.c.l.b16 %v188
  %v586 = vunpack.c.h.b16 %v188
  %v587 = vunpack.c.l.b16 %v189
  %v588 = vunpack.c.h.b16 %v189
  %v589 = vunpack.c.l.b16 %v190
  %v590 = vunpack.c.h.b16 %v190
  %v591 = vunpack.c.l.b16 %v191
  %v592 = vunpack.c.h.b16 %v191
  %v593 = vunpack.c.l.b16 %v192
  %v594 = vunpack.c.h.b16 %v192
  %v595 = vunpack.c.l.b16 %v193
  %v596 = vunpack.c.h.b16 %v193
  %v597 = vunpack.c.l.b16 %v194
  %v598 = vunpack.c.h.b16 %v194
  %v599 = vunpack.c.l.b16 %v195
  %v600 = vunpack.c.h.b16 %v195
  %v601 = vunpack.c.l.b16 %v196
  %v602 = vunpack.c.h.b16 %v196
  %v603 = vpack.c.b16 %v351, %v347
  %v604 = vpack.c.b16 %v352, %v348
  %v605 = vpack.c.b16 %v353, %v349
  %v606 = vpack.c.b16 %v354, %v350
  %v607 = vpack.c.b16 %v359, %v355
  %v608 = vpack.c.b16 %v360, %v356
  %v609 = vpack.c.b16 %v361, %v357
  %v610 = vpack.c.b16 %v362, %v358
  %v611 = vpack.c.b16 %v367, %v363
  %v612 = vpack.c.b16 %v368, %v364
  %v613 = vpack.c.b16 %v369, %v365
  %v614 = vpack.c.b16 %v370, %v366
  %v615 = vpack.c.b16 %v375, %v371
  %v616 = vpack.c.b16 %v376, %v372
  %v617 = vpack.c.b16 %v377, %v373
  %v618 = vpack.c.b16 %v378, %v374
  %v619 = vpack.c.b16 %v383, %v379
  %v620 = vpack.c.b16 %v384, %v380
  %v621 = vpack.c.b16 %v385, %v381
  %v622 = vpack.c.b16 %v386, %v382
  %v623 = vpack.c.b16 %v391, %v387
  %v624 = vpack.c.b16 %v392, %v388
  %v625 = vpack.c.b16 %v393, %v389
  %v626 = vpack.c.b16 %v394, %v390
  %v627 = vpack.c.b16 %v399, %v395
  %v628 = vpack.c.b16 %v400, %v396
  %v629 = vpack.c.b16 %v401, %v397
  %v630 = vpack.c.b16 %v402, %v398
  %v631 = vpack.c.b16 %v407, %v403
  %v632 = vpack.c.b16 %v408, %v404
  %v633 = vpack.c.b16 %v409, %v405
  %v634 = vpack.c.b16 %v410, %v406
  %v635 = vpack.c.b16 %v415, %v411
  %v636 = vpack.c.b16 %v416, %v412
  %v637 = vpack.c.b16 %v417, %v413
  %v638 = vpack.c.b16 %v418, %v414
  %v639 = vpack.c.b16 %v423, %v419
  %v640 = vpack.c.b16 %v424, %v420
  %v641 = vpack.c.b16 %v425, %v421
  %v642 = vpack.c.b16 %v426, %v422
  %v643 = vpack.c.b16 %v431, %v427
  %v644 = vpack.c.b16 %v432, %v428
  %v645 = vpack.c.b16 %v433, %v429
  %v646 = vpack.c.b16 %v434, %v430
  %v647 = vpack.c.b16 %v439, %v435
  %v648 = vpack.c.b16 %v440, %v436
  %v649 = vpack.c.b16 %v441, %v437
  %v650 = vpack.c.b16 %v442, %v438
  %v651 = vpack.c.b16 %v447, %v443
  %v652 = vpack.c.b16 %v448, %v444
  %v653 = vpack.c.b16 %v449, %v445
  %v654 = vpack.c.b16 %v450, %v446
  %v655 = vpack.c.b16 %v455, %v451
  %v656 = vpack.c.b16 %v456, %v452
  %v657 = vpack.c.b16 %v457, %v453
  %v658 = vpack.c.b16 %v458, %v454
  %v659 = vpack.c.b16 %v463, %v459
  %v660 = vpack.c.b16 %v464, %v460
  %v661 = vpack.c.b16 %v465, %v461
  %v662 = vpack.c.b16 %v466, %v462
  %v663 = vpack.c.b16 %v471, %v467
  %v664 = vpack.c.b16 %v472, %v468
  %v665 = vpack.c.b16 %v473, %v469
  %v666 = vpack.c.b16 %v474, %v470
  %v667 = vpack.c.b16 %v479, %v475
  %v668 = vpack.c.b16 %v480, %v476
  %v669 = vpack.c.b16 %v481, %v477
  %v670 = vpack.c.b16 %v482, %v478
  %v671 = vpack.c.b16 %v487, %v483
  %v672 = vpack.c.b16 %v488, %v484
  %v673 = vpack.c.b16 %v489, %v485
  %v674 = vpack.c.b16 %v490, %v486
  %v675 = vpack.c.b16 %v495, %v491
  %v676 = vpack.c.b16 %v496, %v492
  %v677 = vpack.c.b16 %v497, %v493
  %v678 = vpack.c.b16 %v498, %v494
  %v679 = vpack.c.b16 %v503, %v499
  %v680 = vpack.c.b16 %v504, %v500
  %v681 = vpack.c.b16 %v505, %v501
  %v682 = vpack.c.b16 %v506, %v502
  %v683 = vpack.c.b16 %v511, %v507
  %v684 = vpack.c.b16 %v512, %v508
  %v685 = vpack.c.b16 %v513, %v509
  %v686 = vpack.c.b16 %v514, %v510
  %v687 = vpack.c.b16 %v519, %v515
  %v688 = vpack.c.b16 %v520, %v516
  %v689 = vpack.c.b16 %v521, %v517
  %v690 = vpack.c.b16 %v522, %v518
  %v691 = vpack.c.b16 %v527, %v523
  %v692 = vpack.c.b16 %v528, %v524
  %v693 = vpack.c.b16 %v529, %v525
  %v694 = vpack.c.b16 %v530, %v526
  %v695 = vpack.c.b16 %v535, %v531
  %v696 = vpack.c.b16 %v536, %v532
  %v697 = vpack.c.b16 %v537, %v533
  %v698 = vpack.c.b16 %v538, %v534
  %v699 = vpack.c.b16 %v543, %v539
  %v700 = vpack.c.b16 %v544, %v540
  %v701 = vpack.c.b16 %v545, %v541
  %v702 = vpack.c.b16 %v546, %v542
  %v703 = vpack.c.b16 %v551, %v547
  %v704 = vpack.c.b16 %v552, %v548
  %v705 = vpack.c.b16 %v553, %v549
  %v706 = vpack.c.b16 %v554, %v550
  %v707 = vpack.c.b16 %v559, %v555
  %v708 = vpack.c.b16 %v560, %v556
  %v709 = vpack.c.b16 %v561, %v557
  %v710 = vpack.c.b16 %v562, %v558
  %v711 = vpack.c.b16 %v567, %v563
  %v712 = vpack.c.b16 %v568, %v564
  %v713 = vpack.c.b16 %v569, %v565
  %v714 = vpack.c.b16 %v570, %v566
  %v715 = vpack.c.b16 %v575, %v571
  %v716 = vpack.c.b16 %v576, %v572
  %v717 = vpack.c.b16 %v577, %v573
  %v718 = vpack.c.b16 %v578, %v574
  %v719 = vpack.c.b16 %v583, %v579
  %v720 = vpack.c.b16 %v584, %v580
  %v721 = vpack.c.b16 %v585, %v581
  %v722 = vpack.c.b16 %v586, %v582
  %v723 = vpack.c.b16 %v591, %v587
  %v724 = vpack.c.b16 %v592, %v588
  %v725 = vpack.c.b16 %v593, %v589
  %v726 = vpack.c.b16 %v594, %v590
  %v727 = vpack.c.b16 %v599, %v595
  %v728 = vpack.c.b16 %v600, %v596
  %v729 = vpack.c.b16 %v601, %v597
  %v730 = vpack.c.b16 %v602, %v598
  %859 = vmatprep.subr.bf16.mxu0 %v604
  %860 = vmatpush1.bf16.msra.mxu0 %v603
  %861 = vmatprep.subr.bf16.mxu0 %v608
  %862 = vmatpush1.bf16.msra.mxu0 %v607
  %863 = vmatprep.subr.bf16.mxu0 %v612
  %864 = vmatpush1.bf16.msra.mxu0 %v611
  %865 = vmatprep.subr.bf16.mxu0 %v616
  %866 = vmatpush1.bf16.msra.mxu0 %v615
  %867 = vmatprep.subr.bf16.mxu0 %v620
  %868 = vmatpush1.bf16.msra.mxu0 %v619
  %869 = vmatprep.subr.bf16.mxu0 %v624
  %870 = vmatpush1.bf16.msra.mxu0 %v623
  %871 = vmatprep.subr.bf16.mxu0 %v628
  %872 = vmatpush1.bf16.msra.mxu0 %v627
  %873 = vmatprep.subr.bf16.mxu0 %v632
  %874 = vmatpush1.bf16.msra.mxu0 %v631
  %875 = vmatprep.subr.bf16.mxu0 %v636
  %876 = vmatpush1.bf16.msra.mxu0 %v635
  %877 = vmatprep.subr.bf16.mxu0 %v640
  %878 = vmatpush1.bf16.msra.mxu0 %v639
  %879 = vmatprep.subr.bf16.mxu0 %v644
  %880 = vmatpush1.bf16.msra.mxu0 %v643
  %881 = vmatprep.subr.bf16.mxu0 %v648
  %882 = vmatpush1.bf16.msra.mxu0 %v647
  %883 = vmatprep.subr.bf16.mxu0 %v652
  %884 = vmatpush1.bf16.msra.mxu0 %v651
  %885 = vmatprep.subr.bf16.mxu0 %v656
  %886 = vmatpush1.bf16.msra.mxu0 %v655
  %887 = vmatprep.subr.bf16.mxu0 %v660
  %888 = vmatpush1.bf16.msra.mxu0 %v659
  %889 = vmatprep.subr.bf16.mxu0 %v664
  %890 = vmatpush1.bf16.msra.mxu0 %v663
  %891 = vmatprep.mubr.bf16.mxu0 %v54
  %892 = vmatmul.mubr.bf16.gmra.mrb[0].mxu0 %v53
  %v893 = vpop.f32.mrb[0].mxu0
  %v894 = vadd.f32 %v202, %v893
  %v895 = vpop.f32.mrb[0].mxu0
  %v896 = vadd.f32 %v206, %v895
  %v897 = vpop.f32.mrb[0].mxu0
  %v898 = vadd.f32 %v202, %v897
  %v899 = vpop.f32.mrb[0].mxu0
  %v900 = vadd.f32 %v206, %v899
  %901 = vmatprep.mubr.bf16.mxu0 %v58
  %902 = vmatmul.mubr.bf16.gmra.mrb[0].mxu0 %v57
  %v903 = vpop.f32.mrb[0].mxu0
  %v904 = vadd.f32 %v202, %v903
  %v905 = vpop.f32.mrb[0].mxu0
  %v906 = vadd.f32 %v206, %v905
  %v907 = vpop.f32.mrb[0].mxu0
  %v908 = vadd.f32 %v202, %v907
  %v909 = vpop.f32.mrb[0].mxu0
  %v910 = vadd.f32 %v206, %v909
  %911 = vmatprep.mubr.bf16.mxu0 %v62
  %912 = vmatmul.mubr.bf16.gmra.mrb[0].mxu0 %v61
  %v913 = vpop.f32.mrb[0].mxu0
  %v914 = vadd.f32 %v202, %v913
  %v915 = vpop.f32.mrb[0].mxu0
  %v916 = vadd.f32 %v206, %v915
  %v917 = vpop.f32.mrb[0].mxu0
  %v918 = vadd.f32 %v202, %v917
  %v919 = vpop.f32.mrb[0].mxu0
  %v920 = vadd.f32 %v206, %v919
  %921 = vmatprep.mubr.bf16.mxu0 %v66
  %922 = vmatmul.mubr.bf16.gmra.mrb[0].mxu0 %v65
  %v923 = vpop.f32.mrb[0].mxu0
  %v924 = vadd.f32 %v202, %v923
  %v925 = vpop.f32.mrb[0].mxu0
  %v926 = vadd.f32 %v206, %v925
  %v927 = vpop.f32.mrb[0].mxu0
  %v928 = vadd.f32 %v202, %v927
  %v929 = vpop.f32.mrb[0].mxu0
  %v930 = vadd.f32 %v206, %v929
  %931 = vdwg.mxu0
  %932 = vmatprep.subr.bf16.mxu0 %v668
  %933 = vmatpush1.bf16.msra.mxu0 %v667
  %934 = vmatprep.subr.bf16.mxu0 %v672
  %935 = vmatpush1.bf16.msra.mxu0 %v671
  %936 = vmatprep.subr.bf16.mxu0 %v676
  %937 = vmatpush1.bf16.msra.mxu0 %v675
  %938 = vmatprep.subr.bf16.mxu0 %v680
  %939 = vmatpush1.bf16.msra.mxu0 %v679
  %940 = vmatprep.subr.bf16.mxu0 %v684
  %941 = vmatpush1.bf16.msra.mxu0 %v683
  %942 = vmatprep.subr.bf16.mxu0 %v688
  %943 = vmatpush1.bf16.msra.mxu0 %v687
  %944 = vmatprep.subr.bf16.mxu0 %v692
  %945 = vmatpush1.bf16.msra.mxu0 %v691
  %946 = vmatprep.subr.bf16.mxu0 %v696
  %947 = vmatpush1.bf16.msra.mxu0 %v695
  %948 = vmatprep.subr.bf16.mxu0 %v700
  %949 = vmatpush1.bf16.msra.mxu0 %v699
  %950 = vmatprep.subr.bf16.mxu0 %v704
  %951 = vmatpush1.bf16.msra.mxu0 %v703
  %952 = vmatprep.subr.bf16.mxu0 %v708
  %953 = vmatpush1.bf16.msra.mxu0 %v707
  %954 = vmatprep.subr.bf16.mxu0 %v712
  %955 = vmatpush1.bf16.msra.mxu0 %v711
  %956 = vmatprep.subr.bf16.mxu0 %v716
  %957 = vmatpush1.bf16.msra.mxu0 %v715
  %958 = vmatprep.subr.bf16.mxu0 %v720
  %959 = vmatpush1.bf16.msra.mxu0 %v719
  %960 = vmatprep.subr.bf16.mxu0 %v724
  %961 = vmatpush1.bf16.msra.mxu0 %v723
  %962 = vmatprep.subr.bf16.mxu0 %v728
  %963 = vmatpush1.bf16.msra.mxu0 %v727
  %964 = vmatprep.mubr.bf16.mxu0 %v56
  %965 = vmatmul.mubr.bf16.gmra.mrb[0].mxu0 %v55
  %v966 = vpop.f32.mrb[0].mxu0
  %v967 = vadd.f32 %v894, %v966
  %v968 = vpop.f32.mrb[0].mxu0
  %v969 = vadd.f32 %v896, %v968
  %v970 = vpop.f32.mrb[0].mxu0
  %v971 = vadd.f32 %v898, %v970
  %v972 = vpop.f32.mrb[0].mxu0
  %v973 = vadd.f32 %v900, %v972
  %974 = vmatprep.mubr.bf16.mxu0 %v60
  %975 = vmatmul.mubr.bf16.gmra.mrb[0].mxu0 %v59
  %v976 = vpop.f32.mrb[0].mxu0
  %v977 = vadd.f32 %v904, %v976
  %v978 = vpop.f32.mrb[0].mxu0
  %v979 = vadd.f32 %v906, %v978
  %v980 = vpop.f32.mrb[0].mxu0
  %v981 = vadd.f32 %v908, %v980
  %v982 = vpop.f32.mrb[0].mxu0
  %v983 = vadd.f32 %v910, %v982
  %984 = vmatprep.mubr.bf16.mxu0 %v64
  %985 = vmatmul.mubr.bf16.gmra.mrb[0].mxu0 %v63
  %v986 = vpop.f32.mrb[0].mxu0
  %v987 = vadd.f32 %v914, %v986
  %v988 = vpop.f32.mrb[0].mxu0
  %v989 = vadd.f32 %v916, %v988
  %v990 = vpop.f32.mrb[0].mxu0
  %v991 = vadd.f32 %v918, %v990
  %v992 = vpop.f32.mrb[0].mxu0
  %v993 = vadd.f32 %v920, %v992
  %994 = vmatprep.mubr.bf16.mxu0 %v68
  %995 = vmatmul.mubr.bf16.gmra.mrb[0].mxu0 %v67
  %v996 = vpop.f32.mrb[0].mxu0
  %v997 = vadd.f32 %v924, %v996
  %v998 = vpop.f32.mrb[0].mxu0
  %v999 = vadd.f32 %v926, %v998
  %v1000 = vpop.f32.mrb[0].mxu0
  %v1001 = vadd.f32 %v928, %v1000
  %v1002 = vpop.f32.mrb[0].mxu0
  %v1003 = vadd.f32 %v930, %v1002
  %1004 = vdwg.mxu0
  %1005 = vmatprep.subr.bf16.mxu0 %v606
  %1006 = vmatpush1.bf16.msra.mxu0 %v605
  %1007 = vmatprep.subr.bf16.mxu0 %v610
  %1008 = vmatpush1.bf16.msra.mxu0 %v609
  %1009 = vmatprep.subr.bf16.mxu0 %v614
  %1010 = vmatpush1.bf16.msra.mxu0 %v613
  %1011 = vmatprep.subr.bf16.mxu0 %v618
  %1012 = vmatpush1.bf16.msra.mxu0 %v617
  %1013 = vmatprep.subr.bf16.mxu0 %v622
  %1014 = vmatpush1.bf16.msra.mxu0 %v621
  %1015 = vmatprep.subr.bf16.mxu0 %v626
  %1016 = vmatpush1.bf16.msra.mxu0 %v625
  %1017 = vmatprep.subr.bf16.mxu0 %v630
  %1018 = vmatpush1.bf16.msra.mxu0 %v629
  %1019 = vmatprep.subr.bf16.mxu0 %v634
  %1020 = vmatpush1.bf16.msra.mxu0 %v633
  %1021 = vmatprep.subr.bf16.mxu0 %v638
  %1022 = vmatpush1.bf16.msra.mxu0 %v637
  %1023 = vmatprep.subr.bf16.mxu0 %v642
  %1024 = vmatpush1.bf16.msra.mxu0 %v641
  %1025 = vmatprep.subr.bf16.mxu0 %v646
  %1026 = vmatpush1.bf16.msra.mxu0 %v645
  %1027 = vmatprep.subr.bf16.mxu0 %v650
  %1028 = vmatpush1.bf16.msra.mxu0 %v649
  %1029 = vmatprep.subr.bf16.mxu0 %v654
  %1030 = vmatpush1.bf16.msra.mxu0 %v653
  %1031 = vmatprep.subr.bf16.mxu0 %v658
  %1032 = vmatpush1.bf16.msra.mxu0 %v657
  %1033 = vmatprep.subr.bf16.mxu0 %v662
  %1034 = vmatpush1.bf16.msra.mxu0 %v661
  %1035 = vmatprep.subr.bf16.mxu0 %v666
  %1036 = vmatpush1.bf16.msra.mxu0 %v665
  %1037 = vmatprep.mubr.bf16.mxu0 %v54
  %1038 = vmatmul.mubr.bf16.gmra.mrb[0].mxu0 %v53
  %v1039 = vpop.f32.mrb[0].mxu0
  %v1040 = vadd.f32 %v210, %v1039
  %v1041 = vpop.f32.mrb[0].mxu0
  %v1042 = vadd.f32 %v214, %v1041
  %v1043 = vpop.f32.mrb[0].mxu0
  %v1044 = vadd.f32 %v210, %v1043
  %v1045 = vpop.f32.mrb[0].mxu0
  %v1046 = vadd.f32 %v214, %v1045
  %1047 = vmatprep.mubr.bf16.mxu0 %v58
  %1048 = vmatmul.mubr.bf16.gmra.mrb[0].mxu0 %v57
  %v1049 = vpop.f32.mrb[0].mxu0
  %v1050 = vadd.f32 %v210, %v1049
  %v1051 = vpop.f32.mrb[0].mxu0
  %v1052 = vadd.f32 %v214, %v1051
  %v1053 = vpop.f32.mrb[0].mxu0
  %v1054 = vadd.f32 %v210, %v1053
  %v1055 = vpop.f32.mrb[0].mxu0
  %v1056 = vadd.f32 %v214, %v1055
  %1057 = vmatprep.mubr.bf16.mxu0 %v62
  %1058 = vmatmul.mubr.bf16.gmra.mrb[0].mxu0 %v61
  %v1059 = vpop.f32.mrb[0].mxu0
  %v1060 = vadd.f32 %v210, %v1059
  %v1061 = vpop.f32.mrb[0].mxu0
  %v1062 = vadd.f32 %v214, %v1061
  %v1063 = vpop.f32.mrb[0].mxu0
  %v1064 = vadd.f32 %v210, %v1063
  %v1065 = vpop.f32.mrb[0].mxu0
  %v1066 = vadd.f32 %v214, %v1065
  %1067 = vmatprep.mubr.bf16.mxu0 %v66
  %1068 = vmatmul.mubr.bf16.gmra.mrb[0].mxu0 %v65
  %v1069 = vpop.f32.mrb[0].mxu0
  %v1070 = vadd.f32 %v210, %v1069
  %v1071 = vpop.f32.mrb[0].mxu0
  %v1072 = vadd.f32 %v214, %v1071
  %v1073 = vpop.f32.mrb[0].mxu0
  %v1074 = vadd.f32 %v210, %v1073
  %v1075 = vpop.f32.mrb[0].mxu0
  %v1076 = vadd.f32 %v214, %v1075
  %1077 = vdwg.mxu0
  %1078 = vmatprep.subr.bf16.mxu0 %v670
  %1079 = vmatpush1.bf16.msra.mxu0 %v669
  %1080 = vmatprep.subr.bf16.mxu0 %v674
  %1081 = vmatpush1.bf16.msra.mxu0 %v673
  %1082 = vmatprep.subr.bf16.mxu0 %v678
  %1083 = vmatpush1.bf16.msra.mxu0 %v677
  %1084 = vmatprep.subr.bf16.mxu0 %v682
  %1085 = vmatpush1.bf16.msra.mxu0 %v681
  %1086 = vmatprep.subr.bf16.mxu0 %v686
  %1087 = vmatpush1.bf16.msra.mxu0 %v685
  %1088 = vmatprep.subr.bf16.mxu0 %v690
  %1089 = vmatpush1.bf16.msra.mxu0 %v689
  %1090 = vmatprep.subr.bf16.mxu0 %v694
  %1091 = vmatpush1.bf16.msra.mxu0 %v693
  %1092 = vmatprep.subr.bf16.mxu0 %v698
  %1093 = vmatpush1.bf16.msra.mxu0 %v697
  %1094 = vmatprep.subr.bf16.mxu0 %v702
  %1095 = vmatpush1.bf16.msra.mxu0 %v701
  %1096 = vmatprep.subr.bf16.mxu0 %v706
  %1097 = vmatpush1.bf16.msra.mxu0 %v705
  %1098 = vmatprep.subr.bf16.mxu0 %v710
  %1099 = vmatpush1.bf16.msra.mxu0 %v709
  %1100 = vmatprep.subr.bf16.mxu0 %v714
  %1101 = vmatpush1.bf16.msra.mxu0 %v713
  %1102 = vmatprep.subr.bf16.mxu0 %v718
  %1103 = vmatpush1.bf16.msra.mxu0 %v717
  %1104 = vmatprep.subr.bf16.mxu0 %v722
  %1105 = vmatpush1.bf16.msra.mxu0 %v721
  %1106 = vmatprep.subr.bf16.mxu0 %v726
  %1107 = vmatpush1.bf16.msra.mxu0 %v725
  %1108 = vmatprep.subr.bf16.mxu0 %v730
  %1109 = vmatpush1.bf16.msra.mxu0 %v729
  %1110 = vmatprep.mubr.bf16.mxu0 %v56
  %1111 = vmatmul.mubr.bf16.gmra.mrb[0].mxu0 %v55
  %v1112 = vpop.f32.mrb[0].mxu0
  %v1113 = vadd.f32 %v1040, %v1112
  %v1114 = vpop.f32.mrb[0].mxu0
  %v1115 = vadd.f32 %v1042, %v1114
  %v1116 = vpop.f32.mrb[0].mxu0
  %v1117 = vadd.f32 %v1044, %v1116
  %v1118 = vpop.f32.mrb[0].mxu0
  %v1119 = vadd.f32 %v1046, %v1118
  %1120 = vmatprep.mubr.bf16.mxu0 %v60
  %1121 = vmatmul.mubr.bf16.gmra.mrb[0].mxu0 %v59
  %v1122 = vpop.f32.mrb[0].mxu0
  %v1123 = vadd.f32 %v1050, %v1122
  %v1124 = vpop.f32.mrb[0].mxu0
  %v1125 = vadd.f32 %v1052, %v1124
  %v1126 = vpop.f32.mrb[0].mxu0
  %v1127 = vadd.f32 %v1054, %v1126
  %v1128 = vpop.f32.mrb[0].mxu0
  %v1129 = vadd.f32 %v1056, %v1128
  %1130 = vmatprep.mubr.bf16.mxu0 %v64
  %1131 = vmatmul.mubr.bf16.gmra.mrb[0].mxu0 %v63
  %v1132 = vpop.f32.mrb[0].mxu0
  %v1133 = vadd.f32 %v1060, %v1132
  %v1134 = vpop.f32.mrb[0].mxu0
  %v1135 = vadd.f32 %v1062, %v1134
  %v1136 = vpop.f32.mrb[0].mxu0
  %v1137 = vadd.f32 %v1064, %v1136
  %v1138 = vpop.f32.mrb[0].mxu0
  %v1139 = vadd.f32 %v1066, %v1138
  %1140 = vmatprep.mubr.bf16.mxu0 %v68
  %1141 = vmatmul.mubr.bf16.gmra.mrb[0].mxu0 %v67
  %v1142 = vpop.f32.mrb[0].mxu0
  %v1143 = vadd.f32 %v1070, %v1142
  %v1144 = vpop.f32.mrb[0].mxu0
  %v1145 = vadd.f32 %v1072, %v1144
  %v1146 = vpop.f32.mrb[0].mxu0
  %v1147 = vadd.f32 %v1074, %v1146
  %v1148 = vpop.f32.mrb[0].mxu0
  %v1149 = vadd.f32 %v1076, %v1148
  %1150 = vdwg.mxu0
  %v1151 = vmax.f32 %v967, 0.0
  %v1152 = vmax.f32 %v969, 0.0
  %v1153 = vmax.f32 %v1113, 0.0
  %v1154 = vmax.f32 %v1115, 0.0
  %v1155 = vmax.f32 %v971, 0.0
  %v1156 = vmax.f32 %v973, 0.0
  %v1157 = vmax.f32 %v1117, 0.0
  %v1158 = vmax.f32 %v1119, 0.0
  %v1159 = vmax.f32 %v977, 0.0
  %v1160 = vmax.f32 %v979, 0.0
  %v1161 = vmax.f32 %v1123, 0.0
  %v1162 = vmax.f32 %v1125, 0.0
  %v1163 = vmax.f32 %v981, 0.0
  %v1164 = vmax.f32 %v983, 0.0
  %v1165 = vmax.f32 %v1127, 0.0
  %v1166 = vmax.f32 %v1129, 0.0
  %v1167 = vmax.f32 %v987, 0.0
  %v1168 = vmax.f32 %v989, 0.0
  %v1169 = vmax.f32 %v1133, 0.0
  %v1170 = vmax.f32 %v1135, 0.0
  %v1171 = vmax.f32 %v991, 0.0
  %v1172 = vmax.f32 %v993, 0.0
  %v1173 = vmax.f32 %v1137, 0.0
  %v1174 = vmax.f32 %v1139, 0.0
  %v1175 = vmax.f32 %v997, 0.0
  %v1176 = vmax.f32 %v999, 0.0
  %v1177 = vmax.f32 %v1143, 0.0
  %v1178 = vmax.f32 %v1145, 0.0
  %v1179 = vmax.f32 %v1001, 0.0
  %v1180 = vmax.f32 %v1003, 0.0
  %v1181 = vmax.f32 %v1147, 0.0
  %v1182 = vmax.f32 %v1149, 0.0
  %v1183 = vpack.c.bf16 %v1155, %v1151
  %v1184 = vpack.c.bf16 %v1156, %v1152
  %v1185 = vpack.c.bf16 %v1157, %v1153
  %v1186 = vpack.c.bf16 %v1158, %v1154
  %v1187 = vpack.c.bf16 %v1163, %v1159
  %v1188 = vpack.c.bf16 %v1164, %v1160
  %v1189 = vpack.c.bf16 %v1165, %v1161
  %v1190 = vpack.c.bf16 %v1166, %v1162
  %v1191 = vpack.c.bf16 %v1171, %v1167
  %v1192 = vpack.c.bf16 %v1172, %v1168
  %v1193 = vpack.c.bf16 %v1173, %v1169
  %v1194 = vpack.c.bf16 %v1174, %v1170
  %v1195 = vpack.c.bf16 %v1179, %v1175
  %v1196 = vpack.c.bf16 %v1180, %v1176
  %v1197 = vpack.c.bf16 %v1181, %v1177
  %v1198 = vpack.c.bf16 %v1182, %v1178
  %v1199 = vld [vmem:[%s3] sm:$0xf]
  %v1200 = vld [vmem:[%s3 + $0x4] sm:$0xf]
  %v1201 = vld [vmem:[%s3 + $0x8] sm:$0xf]
  %v1202 = vld [vmem:[%s3 + $0xc] sm:$0xf]
  %v1203 = vld [vmem:[%s3 + $0x10] sm:$0xf]
  %v1204 = vld [vmem:[%s3 + $0x14] sm:$0xf]
  %v1205 = vld [vmem:[%s3 + $0x18] sm:$0xf]
  %v1206 = vld [vmem:[%s3 + $0x1c] sm:$0xf]
  %v1207 = vld [vmem:[%s3 + $0x20] sm:$0xf]
  %v1208 = vld [vmem:[%s3 + $0x24] sm:$0xf]
  %v1209 = vld [vmem:[%s3 + $0x28] sm:$0xf]
  %v1210 = vld [vmem:[%s3 + $0x2c] sm:$0xf]
  %v1211 = vld [vmem:[%s3 + $0x30] sm:$0xf]
  %v1212 = vld [vmem:[%s3 + $0x34] sm:$0xf]
  %v1213 = vld [vmem:[%s3 + $0x38] sm:$0xf]
  %v1214 = vld [vmem:[%s3 + $0x3c] sm:$0xf]
  %v1215 = vld [vmem:[%s3 + $0x40] sm:$0xf]
  %v1216 = vld [vmem:[%s3 + $0x44] sm:$0xf]
  %v1217 = vld [vmem:[%s3 + $0x48] sm:$0xf]
  %v1218 = vld [vmem:[%s3 + $0x4c] sm:$0xf]
  %v1219 = vld [vmem:[%s3 + $0x50] sm:$0xf]
  %v1220 = vld [vmem:[%s3 + $0x54] sm:$0xf]
  %v1221 = vld [vmem:[%s3 + $0x58] sm:$0xf]
  %v1222 = vld [vmem:[%s3 + $0x5c] sm:$0xf]
  %v1223 = vld [vmem:[%s3 + $0x60] sm:$0xf]
  %v1224 = vld [vmem:[%s3 + $0x64] sm:$0xf]
  %v1225 = vld [vmem:[%s3 + $0x68] sm:$0xf]
  %v1226 = vld [vmem:[%s3 + $0x6c] sm:$0xf]
  %v1227 = vld [vmem:[%s3 + $0x70] sm:$0xf]
  %v1228 = vld [vmem:[%s3 + $0x74] sm:$0xf]
  %v1229 = vld [vmem:[%s3 + $0x78] sm:$0xf]
  %v1230 = vld [vmem:[%s3 + $0x7c] sm:$0xf]
  %v1231 = vld [vmem:[%s3 + $0x80] sm:$0xf]
  %v1232 = vld [vmem:[%s3 + $0x84] sm:$0xf]
  %v1233 = vld [vmem:[%s3 + $0x88] sm:$0xf]
  %v1234 = vld [vmem:[%s3 + $0x8c] sm:$0xf]
  %v1235 = vld [vmem:[%s3 + $0x90] sm:$0xf]
  %v1236 = vld [vmem:[%s3 + $0x94] sm:$0xf]
  %v1237 = vld [vmem:[%s3 + $0x98] sm:$0xf]
  %v1238 = vld [vmem:[%s3 + $0x9c] sm:$0xf]
  %v1239 = vld [vmem:[%s3 + $0xa0] sm:$0xf]
  %v1240 = vld [vmem:[%s3 + $0xa4] sm:$0xf]
  %v1241 = vld [vmem:[%s3 + $0xa8] sm:$0xf]
  %v1242 = vld [vmem:[%s3 + $0xac] sm:$0xf]
  %v1243 = vld [vmem:[%s3 + $0xb0] sm:$0xf]
  %v1244 = vld [vmem:[%s3 + $0xb4] sm:$0xf]
  %v1245 = vld [vmem:[%s3 + $0xb8] sm:$0xf]
  %v1246 = vld [vmem:[%s3 + $0xbc] sm:$0xf]
  %v1247 = vld [vmem:[%s3 + $0xc0] sm:$0xf]
  %v1248 = vld [vmem:[%s3 + $0xc4] sm:$0xf]
  %v1249 = vld [vmem:[%s3 + $0xc8] sm:$0xf]
  %v1250 = vld [vmem:[%s3 + $0xcc] sm:$0xf]
  %v1251 = vld [vmem:[%s3 + $0xd0] sm:$0xf]
  %v1252 = vld [vmem:[%s3 + $0xd4] sm:$0xf]
  %v1253 = vld [vmem:[%s3 + $0xd8] sm:$0xf]
  %v1254 = vld [vmem:[%s3 + $0xdc] sm:$0xf]
  %v1255 = vld [vmem:[%s3 + $0xe0] sm:$0xf]
  %v1256 = vld [vmem:[%s3 + $0xe4] sm:$0xf]
  %v1257 = vld [vmem:[%s3 + $0xe8] sm:$0xf]
  %v1258 = vld [vmem:[%s3 + $0xec] sm:$0xf]
  %v1259 = vld [vmem:[%s3 + $0xf0] sm:$0xf]
  %v1260 = vld [vmem:[%s3 + $0xf4] sm:$0xf]
  %v1261 = vld [vmem:[%s3 + $0xf8] sm:$0xf]
  %v1262 = vld [vmem:[%s3 + $0xfc] sm:$0xf]
  %v1263 = vld [vmem:[%s4] sm:$0x1]
  %v1265 = vlaneseq
  %v1266 = vshrl.u32 %v1265, 7
  %v1267 = vsub.s32 0, %v1266
  %v1268 = vrot.slane %v1263, %v1267
  %v1334 = vunpack.c.l.b16 %v1199
  %v1335 = vunpack.c.l.b16 %v1200
  %v1336 = vunpack.c.l.b16 %v1201
  %v1337 = vunpack.c.l.b16 %v1202
  %v1338 = vunpack.c.l.b16 %v1203
  %v1339 = vunpack.c.l.b16 %v1204
  %v1340 = vunpack.c.l.b16 %v1205
  %v1341 = vunpack.c.l.b16 %v1206
  %v1342 = vunpack.c.l.b16 %v1207
  %v1343 = vunpack.c.l.b16 %v1208
  %v1344 = vunpack.c.l.b16 %v1209
  %v1345 = vunpack.c.l.b16 %v1210
  %v1346 = vunpack.c.l.b16 %v1211
  %v1347 = vunpack.c.l.b16 %v1212
  %v1348 = vunpack.c.l.b16 %v1213
  %v1349 = vunpack.c.l.b16 %v1214
  %v1350 = vunpack.c.l.b16 %v1215
  %v1351 = vunpack.c.l.b16 %v1216
  %v1352 = vunpack.c.l.b16 %v1217
  %v1353 = vunpack.c.l.b16 %v1218
  %v1354 = vunpack.c.l.b16 %v1219
  %v1355 = vunpack.c.l.b16 %v1220
  %v1356 = vunpack.c.l.b16 %v1221
  %v1357 = vunpack.c.l.b16 %v1222
  %v1358 = vunpack.c.l.b16 %v1223
  %v1359 = vunpack.c.l.b16 %v1224
  %v1360 = vunpack.c.l.b16 %v1225
  %v1361 = vunpack.c.l.b16 %v1226
  %v1362 = vunpack.c.l.b16 %v1227
  %v1363 = vunpack.c.l.b16 %v1228
  %v1364 = vunpack.c.l.b16 %v1229
  %v1365 = vunpack.c.l.b16 %v1230
  %v1366 = vunpack.c.l.b16 %v1231
  %v1367 = vunpack.c.l.b16 %v1232
  %v1368 = vunpack.c.l.b16 %v1233
  %v1369 = vunpack.c.l.b16 %v1234
  %v1370 = vunpack.c.l.b16 %v1235
  %v1371 = vunpack.c.l.b16 %v1236
  %v1372 = vunpack.c.l.b16 %v1237
  %v1373 = vunpack.c.l.b16 %v1238
  %v1374 = vunpack.c.l.b16 %v1239
  %v1375 = vunpack.c.l.b16 %v1240
  %v1376 = vunpack.c.l.b16 %v1241
  %v1377 = vunpack.c.l.b16 %v1242
  %v1378 = vunpack.c.l.b16 %v1243
  %v1379 = vunpack.c.l.b16 %v1244
  %v1380 = vunpack.c.l.b16 %v1245
  %v1381 = vunpack.c.l.b16 %v1246
  %v1382 = vunpack.c.l.b16 %v1247
  %v1383 = vunpack.c.l.b16 %v1248
  %v1384 = vunpack.c.l.b16 %v1249
  %v1385 = vunpack.c.l.b16 %v1250
  %v1386 = vunpack.c.l.b16 %v1251
  %v1387 = vunpack.c.l.b16 %v1252
  %v1388 = vunpack.c.l.b16 %v1253
  %v1389 = vunpack.c.l.b16 %v1254
  %v1390 = vunpack.c.l.b16 %v1255
  %v1391 = vunpack.c.l.b16 %v1256
  %v1392 = vunpack.c.l.b16 %v1257
  %v1393 = vunpack.c.l.b16 %v1258
  %v1394 = vunpack.c.l.b16 %v1259
  %v1395 = vunpack.c.l.b16 %v1260
  %v1396 = vunpack.c.l.b16 %v1261
  %v1397 = vunpack.c.l.b16 %v1262
  %v1398 = vpack.c.b16 %v1335, %v1334
  %v1399 = vpack.c.b16 %v1337, %v1336
  %v1400 = vpack.c.b16 %v1339, %v1338
  %v1401 = vpack.c.b16 %v1341, %v1340
  %v1402 = vpack.c.b16 %v1343, %v1342
  %v1403 = vpack.c.b16 %v1345, %v1344
  %v1404 = vpack.c.b16 %v1347, %v1346
  %v1405 = vpack.c.b16 %v1349, %v1348
  %v1406 = vpack.c.b16 %v1351, %v1350
  %v1407 = vpack.c.b16 %v1353, %v1352
  %v1408 = vpack.c.b16 %v1355, %v1354
  %v1409 = vpack.c.b16 %v1357, %v1356
  %v1410 = vpack.c.b16 %v1359, %v1358
  %v1411 = vpack.c.b16 %v1361, %v1360
  %v1412 = vpack.c.b16 %v1363, %v1362
  %v1413 = vpack.c.b16 %v1365, %v1364
  %v1414 = vpack.c.b16 %v1367, %v1366
  %v1415 = vpack.c.b16 %v1369, %v1368
  %v1416 = vpack.c.b16 %v1371, %v1370
  %v1417 = vpack.c.b16 %v1373, %v1372
  %v1418 = vpack.c.b16 %v1375, %v1374
  %v1419 = vpack.c.b16 %v1377, %v1376
  %v1420 = vpack.c.b16 %v1379, %v1378
  %v1421 = vpack.c.b16 %v1381, %v1380
  %v1422 = vpack.c.b16 %v1383, %v1382
  %v1423 = vpack.c.b16 %v1385, %v1384
  %v1424 = vpack.c.b16 %v1387, %v1386
  %v1425 = vpack.c.b16 %v1389, %v1388
  %v1426 = vpack.c.b16 %v1391, %v1390
  %v1427 = vpack.c.b16 %v1393, %v1392
  %v1428 = vpack.c.b16 %v1395, %v1394
  %v1429 = vpack.c.b16 %v1397, %v1396
  %1462 = vmatprep.subr.bf16.mxu0 0
  %1463 = vmatpush1.bf16.msra.mxu0 %v1398
  %1464 = vmatprep.subr.bf16.mxu0 0
  %1465 = vmatpush1.bf16.msra.mxu0 %v1399
  %1466 = vmatprep.subr.bf16.mxu0 0
  %1467 = vmatpush1.bf16.msra.mxu0 %v1400
  %1468 = vmatprep.subr.bf16.mxu0 0
  %1469 = vmatpush1.bf16.msra.mxu0 %v1401
  %1470 = vmatprep.subr.bf16.mxu0 0
  %1471 = vmatpush1.bf16.msra.mxu0 %v1402
  %1472 = vmatprep.subr.bf16.mxu0 0
  %1473 = vmatpush1.bf16.msra.mxu0 %v1403
  %1474 = vmatprep.subr.bf16.mxu0 0
  %1475 = vmatpush1.bf16.msra.mxu0 %v1404
  %1476 = vmatprep.subr.bf16.mxu0 0
  %1477 = vmatpush1.bf16.msra.mxu0 %v1405
  %1478 = vmatprep.subr.bf16.mxu0 0
  %1479 = vmatpush1.bf16.msra.mxu0 %v1406
  %1480 = vmatprep.subr.bf16.mxu0 0
  %1481 = vmatpush1.bf16.msra.mxu0 %v1407
  %1482 = vmatprep.subr.bf16.mxu0 0
  %1483 = vmatpush1.bf16.msra.mxu0 %v1408
  %1484 = vmatprep.subr.bf16.mxu0 0
  %1485 = vmatpush1.bf16.msra.mxu0 %v1409
  %1486 = vmatprep.subr.bf16.mxu0 0
  %1487 = vmatpush1.bf16.msra.mxu0 %v1410
  %1488 = vmatprep.subr.bf16.mxu0 0
  %1489 = vmatpush1.bf16.msra.mxu0 %v1411
  %1490 = vmatprep.subr.bf16.mxu0 0
  %1491 = vmatpush1.bf16.msra.mxu0 %v1412
  %1492 = vmatprep.subr.bf16.mxu0 0
  %1493 = vmatpush1.bf16.msra.mxu0 %v1413
  %1494 = vmatprep.mubr.bf16.mxu0 %v1184
  %1495 = vmatmul.mubr.bf16.gmra.mrb[0].mxu0 %v1183
  %v1496 = vpop.f32.mrb[0].mxu0
  %v1497 = vadd.f32 %v1268, %v1496
  %v1498 = vpop.f32.mrb[0].mxu0
  %v1499 = vpop.f32.mrb[0].mxu0
  %v1500 = vadd.f32 %v1268, %v1499
  %v1501 = vpop.f32.mrb[0].mxu0
  %1502 = vmatprep.mubr.bf16.mxu0 %v1188
  %1503 = vmatmul.mubr.bf16.gmra.mrb[0].mxu0 %v1187
  %v1504 = vpop.f32.mrb[0].mxu0
  %v1505 = vadd.f32 %v1268, %v1504
  %v1506 = vpop.f32.mrb[0].mxu0
  %v1507 = vpop.f32.mrb[0].mxu0
  %v1508 = vadd.f32 %v1268, %v1507
  %v1509 = vpop.f32.mrb[0].mxu0
  %1510 = vmatprep.mubr.bf16.mxu0 %v1192
  %1511 = vmatmul.mubr.bf16.gmra.mrb[0].mxu0 %v1191
  %v1512 = vpop.f32.mrb[0].mxu0
  %v1513 = vadd.f32 %v1268, %v1512
  %v1514 = vpop.f32.mrb[0].mxu0
  %v1515 = vpop.f32.mrb[0].mxu0
  %v1516 = vadd.f32 %v1268, %v1515
  %v1517 = vpop.f32.mrb[0].mxu0
  %1518 = vmatprep.mubr.bf16.mxu0 %v1196
  %1519 = vmatmul.mubr.bf16.gmra.mrb[0].mxu0 %v1195
  %v1520 = vpop.f32.mrb[0].mxu0
  %v1521 = vadd.f32 %v1268, %v1520
  %v1522 = vpop.f32.mrb[0].mxu0
  %v1523 = vpop.f32.mrb[0].mxu0
  %v1524 = vadd.f32 %v1268, %v1523
  %v1525 = vpop.f32.mrb[0].mxu0
  %1526 = vdwg.mxu0
  %1527 = vmatprep.subr.bf16.mxu0 0
  %1528 = vmatpush1.bf16.msra.mxu0 %v1414
  %1529 = vmatprep.subr.bf16.mxu0 0
  %1530 = vmatpush1.bf16.msra.mxu0 %v1415
  %1531 = vmatprep.subr.bf16.mxu0 0
  %1532 = vmatpush1.bf16.msra.mxu0 %v1416
  %1533 = vmatprep.subr.bf16.mxu0 0
  %1534 = vmatpush1.bf16.msra.mxu0 %v1417
  %1535 = vmatprep.subr.bf16.mxu0 0
  %1536 = vmatpush1.bf16.msra.mxu0 %v1418
  %1537 = vmatprep.subr.bf16.mxu0 0
  %1538 = vmatpush1.bf16.msra.mxu0 %v1419
  %1539 = vmatprep.subr.bf16.mxu0 0
  %1540 = vmatpush1.bf16.msra.mxu0 %v1420
  %1541 = vmatprep.subr.bf16.mxu0 0
  %1542 = vmatpush1.bf16.msra.mxu0 %v1421
  %1543 = vmatprep.subr.bf16.mxu0 0
  %1544 = vmatpush1.bf16.msra.mxu0 %v1422
  %1545 = vmatprep.subr.bf16.mxu0 0
  %1546 = vmatpush1.bf16.msra.mxu0 %v1423
  %1547 = vmatprep.subr.bf16.mxu0 0
  %1548 = vmatpush1.bf16.msra.mxu0 %v1424
  %1549 = vmatprep.subr.bf16.mxu0 0
  %1550 = vmatpush1.bf16.msra.mxu0 %v1425
  %1551 = vmatprep.subr.bf16.mxu0 0
  %1552 = vmatpush1.bf16.msra.mxu0 %v1426
  %1553 = vmatprep.subr.bf16.mxu0 0
  %1554 = vmatpush1.bf16.msra.mxu0 %v1427
  %1555 = vmatprep.subr.bf16.mxu0 0
  %1556 = vmatpush1.bf16.msra.mxu0 %v1428
  %1557 = vmatprep.subr.bf16.mxu0 0
  %1558 = vmatpush1.bf16.msra.mxu0 %v1429
  %1559 = vmatprep.mubr.bf16.mxu0 %v1186
  %1560 = vmatmul.mubr.bf16.gmra.mrb[0].mxu0 %v1185
  %v1561 = vpop.f32.mrb[0].mxu0
  %v1562 = vadd.f32 %v1497, %v1561
  %v1563 = vpop.f32.mrb[0].mxu0
  %v1564 = vpop.f32.mrb[0].mxu0
  %v1565 = vadd.f32 %v1500, %v1564
  %v1566 = vpop.f32.mrb[0].mxu0
  %1567 = vmatprep.mubr.bf16.mxu0 %v1190
  %1568 = vmatmul.mubr.bf16.gmra.mrb[0].mxu0 %v1189
  %v1569 = vpop.f32.mrb[0].mxu0
  %v1570 = vadd.f32 %v1505, %v1569
  %v1571 = vpop.f32.mrb[0].mxu0
  %v1572 = vpop.f32.mrb[0].mxu0
  %v1573 = vadd.f32 %v1508, %v1572
  %v1574 = vpop.f32.mrb[0].mxu0
  %1575 = vmatprep.mubr.bf16.mxu0 %v1194
  %1576 = vmatmul.mubr.bf16.gmra.mrb[0].mxu0 %v1193
  %v1577 = vpop.f32.mrb[0].mxu0
  %v1578 = vadd.f32 %v1513, %v1577
  %v1579 = vpop.f32.mrb[0].mxu0
  %v1580 = vpop.f32.mrb[0].mxu0
  %v1581 = vadd.f32 %v1516, %v1580
  %v1582 = vpop.f32.mrb[0].mxu0
  %1583 = vmatprep.mubr.bf16.mxu0 %v1198
  %1584 = vmatmul.mubr.bf16.gmra.mrb[0].mxu0 %v1197
  %v1585 = vpop.f32.mrb[0].mxu0
  %v1586 = vadd.f32 %v1521, %v1585
  %v1587 = vpop.f32.mrb[0].mxu0
  %v1588 = vpop.f32.mrb[0].mxu0
  %v1589 = vadd.f32 %v1524, %v1588
  %v1590 = vpop.f32.mrb[0].mxu0
  %1591 = vdwg.mxu0
  %1592 = vst [vmem:[%s5] sm:$0xff] %v1562
  %1593 = vst [vmem:[%s5 + $0x8] sm:$0xff] %v1565
  %1594 = vst [vmem:[%s5 + $0x10] sm:$0xff] %v1570
  %1595 = vst [vmem:[%s5 + $0x18] sm:$0xff] %v1573
  %1596 = vst [vmem:[%s5 + $0x20] sm:$0xff] %v1578
  %1597 = vst [vmem:[%s5 + $0x28] sm:$0xff] %v1581
  %1598 = vst [vmem:[%s5 + $0x30] sm:$0xff] %v1586
  %1599 = vst [vmem:[%s5 + $0x38] sm:$0xff] %v1589
  // Predicated region
  $region22: #{mlp_forward.1} parent=0 // pred_check
    _
  $region23: #{mlp_forward.1} parent=0 // pred_check_branch
    %1601 = sbr.rel (0) target = $region25
  $region24: #{mlp_forward.1} parent=0 // pred_region
    _
  $region25: #{mlp_forward.1} parent=0 // pred_fallthru
    _
  // Predicated region
  $region26: #{mlp_forward.1} parent=0 // pred_check
    _
  $region27: #{mlp_forward.1} parent=0 // pred_check_branch
    %1603 = sbr.rel (0) target = $region29
  $region28: #{mlp_forward.1} parent=0 // pred_region
    _
  $region29: #{mlp_forward.1} parent=0 // pred_fallthru
    _

</llo_original>
